<compile_context>
chip_gen: v6e
topology: v6e:2x2x1
jax: 0.10.0
libtpu: 0.0.40
codegen_flags: <defaults>
</compile_context>

<pallas_src>
import functools

import jax
import jax.numpy as jnp
from jax.experimental import pallas as pl
from jax.experimental.pallas import tpu as pltpu


def _rmsnorm_kernel(x_ref, gamma_ref, o_ref, *, eps, inv_hidden):
    # x_ref: (tile_rows, hidden)  gamma_ref: (1, hidden)
    xf = x_ref[...].astype(jnp.float32)
    # Sum-of-squares over the hidden (lane) axis; scale by 1/hidden (scalar).
    ss = jnp.sum(xf * xf, axis=-1, keepdims=True)
    inv_rms = jax.lax.rsqrt(ss * inv_hidden + eps)            # EUP
    g = gamma_ref[...].astype(jnp.float32)
    # All math in f32, single cast at the end (matches reference numerics).
    o_ref[...] = (xf * inv_rms * g).astype(o_ref.dtype)


def _round_up(n, m):
    return ((n + m - 1) // m) * m


def _vmem_budget_bytes():
    """Generation-aware scoped-VMEM budget (~75% of physical VMEM per core)."""
    try:
        cap = pltpu.get_tpu_info().vmem_capacity_bytes
        return int(cap * 3 // 4)          # v5e/v6e: ~96 MiB, v7x: ~48 MiB
    except Exception:
        return 48 * 1024 * 1024           # safe fallback on any generation


def rmsnorm(x, gamma, eps: float = 1e-5):
    """x: (batch, seq_len, hidden_dim), gamma: (hidden_dim,)."""
    batch, seq_len, hidden = x.shape
    rows = batch * seq_len
    x2d = x.reshape(rows, hidden)
    gamma2d = gamma.reshape(1, hidden)

    itemsize = jnp.dtype(x.dtype).itemsize
    # Sublane packing: 8 rows for 4-byte dtypes, 16 for 2-byte, 32 for 1-byte.
    sub = max(8, 32 // itemsize)

    # Per-row VMEM footprint: double-buffered in + out blocks plus f32
    # in-kernel temporaries (conservative, so headroom is built in).
    per_row_bytes = hidden * (4 * itemsize + 8)
    budget = _vmem_budget_bytes()
    max_rows_by_vmem = max(sub, budget // per_row_bytes)

    # Aim for >= 8 grid steps (>= 4 per TC on v7x) with <= 512-row blocks;
    # 512-row blocks already sit at ~85% of the HBM roofline, so shrinking
    # for more pipeline steps costs nothing.
    tile_rows = min(512, max_rows_by_vmem, _round_up(pl.cdiv(rows, 8), sub))
    tile_rows = max(sub, (tile_rows // sub) * sub)

    grid = (pl.cdiv(rows, tile_rows),)     # partial tail block handled by Pallas

    # Scoped-VMEM limit from the actual block footprint (+25% headroom),
    # never below the default-ish 32 MiB, never above the physical budget.
    block_footprint = tile_rows * per_row_bytes + 8 * hidden * 4
    vmem_limit = min(budget, max(block_footprint * 5 // 4, 32 * 1024 * 1024))

    out2d = pl.pallas_call(
        functools.partial(_rmsnorm_kernel, eps=eps, inv_hidden=1.0 / hidden),
        out_shape=jax.ShapeDtypeStruct((rows, hidden), x.dtype),
        grid_spec=pltpu.PrefetchScalarGridSpec(
            num_scalar_prefetch=0,
            grid=grid,
            in_specs=[
                pl.BlockSpec((tile_rows, hidden), lambda i: (i, 0)),
                pl.BlockSpec((1, hidden), lambda i: (0, 0)),
            ],
            out_specs=pl.BlockSpec((tile_rows, hidden), lambda i: (i, 0)),
        ),
        compiler_params=pltpu.CompilerParams(
            dimension_semantics=("parallel",),
            vmem_limit_bytes=vmem_limit,
        ),
    )(x2d, gamma2d)

    return out2d.reshape(batch, seq_len, hidden)


def _reference(x, gamma, eps):
    xf = x.astype(jnp.float32)
    rms = jnp.sqrt(jnp.mean(xf ** 2, axis=-1, keepdims=True) + eps)
    return (xf / rms * gamma.astype(jnp.float32)).astype(x.dtype)


if __name__ == "__main__":
    key = jax.random.PRNGKey(0)

    # Small shape matching the module's forward: (batch, seq_len, hidden_dim).
    batch, seq_len, hidden_dim = 2, 8, 32
    x = jax.random.normal(key, (batch, seq_len, hidden_dim), dtype=jnp.float32)
    # nn.Parameter(torch.ones(hidden_dim))
    gamma = jnp.ones((hidden_dim,), dtype=jnp.float32)

    out = rmsnorm(x, gamma, eps=1e-5)
    jax.block_until_ready(out)
    ref = _reference(x, gamma, 1e-5)
    assert out.shape == (batch, seq_len, hidden_dim)
    assert jnp.allclose(out, ref, atol=1e-5, rtol=1e-5)

    # Second case: rows not a tile multiple (exercises the Pallas-managed
    # partial tail block) with a lane-dense hidden size.
    x2 = jax.random.normal(jax.random.PRNGKey(1), (3, 5, 128), dtype=jnp.float32)
    g2 = jax.random.normal(jax.random.PRNGKey(2), (128,), dtype=jnp.float32)
    out2 = rmsnorm(x2, g2, eps=1e-5)
    jax.block_until_ready(out2)
    ref2 = _reference(x2, g2, 1e-5)
    assert out2.shape == (3, 5, 128)
    assert jnp.allclose(out2, ref2, atol=1e-5, rtol=1e-5)

    # Third case: bf16 inputs (f32 math inside the kernel, single final cast)
    # with a partial tail block again.
    x3 = jax.random.normal(jax.random.PRNGKey(3), (4, 9, 256)).astype(jnp.bfloat16)
    g3 = jax.random.normal(jax.random.PRNGKey(4), (256,)).astype(jnp.bfloat16)
    out3 = rmsnorm(x3, g3, eps=1e-5)
    jax.block_until_ready(out3)
    ref3 = _reference(x3, g3, 1e-5)
    assert out3.shape == (4, 9, 256)
    assert jnp.allclose(out3.astype(jnp.float32), ref3.astype(jnp.float32),
                        atol=2e-2, rtol=2e-2)

    print("KERNEL_OK")
</pallas_src>

<mosaic_0001>
module attributes {stable_mosaic.version = 11 : i64} {
  func.func @_rmsnorm_kernel(%arg0: i32, %arg1: memref<8x32xf32, #tpu.memory_space<vmem>>, %arg2: memref<1x32xf32, #tpu.memory_space<vmem>>, %arg3: memref<8x32xf32, #tpu.memory_space<vmem>>) attributes {dimension_semantics = [#tpu.dimension_semantics<parallel>], iteration_bounds = array<i64: 2>, scalar_prefetch = 0 : i64, scratch_operands = 0 : i64, tpu.core_type = #tpu.core_type<tc>, window_params = [{transform_indices = @transform_0, window_bounds = array<i64: 8, 32>}, {pipeline_mode = #tpu.pipeline_mode<synchronous>, transform_indices = @transform_1, window_bounds = array<i64: 1, 32>}, {transform_indices = @transform_2, window_bounds = array<i64: 8, 32>}]} {
    %c0 = arith.constant 0 : index
    %c0_0 = arith.constant 0 : index
    %0 = vector.load %arg1[%c0, %c0_0] : memref<8x32xf32, #tpu.memory_space<vmem>>, vector<8x32xf32>
    %1 = arith.mulf %0, %0 : vector<8x32xf32>
    %cst = arith.constant dense<0.000000e+00> : vector<8xf32>
    %2 = vector.multi_reduction <add>, %1, %cst [1] : vector<8x32xf32> to vector<8xf32>
    %3 = vector.shape_cast %2 : vector<8xf32> to vector<8x1xf32>
    %cst_1 = arith.constant 3.125000e-02 : f32
    %4 = vector.broadcast %cst_1 : f32 to vector<8x1xf32>
    %5 = arith.mulf %3, %4 : vector<8x1xf32>
    %cst_2 = arith.constant 9.99999974E-6 : f32
    %6 = vector.broadcast %cst_2 : f32 to vector<8x1xf32>
    %7 = arith.addf %5, %6 : vector<8x1xf32>
    %8 = math.rsqrt %7 : vector<8x1xf32>
    %c0_3 = arith.constant 0 : index
    %c0_4 = arith.constant 0 : index
    %9 = vector.load %arg2[%c0_3, %c0_4] : memref<1x32xf32, #tpu.memory_space<vmem>>, vector<1x32xf32>
    %10 = vector.broadcast %8 : vector<8x1xf32> to vector<8x32xf32>
    %11 = arith.mulf %0, %10 : vector<8x32xf32>
    %12 = vector.broadcast %9 : vector<1x32xf32> to vector<8x32xf32>
    %13 = arith.mulf %11, %12 : vector<8x32xf32>
    %c0_5 = arith.constant 0 : index
    %c0_6 = arith.constant 0 : index
    %14 = vector.load %arg3[%c0_5, %c0_6] : memref<8x32xf32, #tpu.memory_space<vmem>>, vector<8x32xf32>
    tpu.vector_store %arg3[%c0_5, %c0_6], %13 {strides = array<i32>} : memref<8x32xf32, #tpu.memory_space<vmem>>, vector<8x32xf32>,
    return
  }
  func.func @transform_0(%arg0: i32) -> (i32, i32) {
    %c0_i32 = arith.constant 0 : i32
    %c0_i32_0 = arith.constant 0 : i32
    return %arg0, %c0_i32 : i32, i32
  }
  func.func @transform_1(%arg0: i32) -> (i32, i32) {
    %c0_i32 = arith.constant 0 : i32
    %c0_i32_0 = arith.constant 0 : i32
    %c0_i32_1 = arith.constant 0 : i32
    return %c0_i32, %c0_i32_0 : i32, i32
  }
  func.func @transform_2(%arg0: i32) -> (i32, i32) {
    %c0_i32 = arith.constant 0 : i32
    %c0_i32_0 = arith.constant 0 : i32
    return %arg0, %c0_i32 : i32, i32
  }
}

</mosaic_0001>

<llo_original>
// kernel: tpu_custom_call.1
$region0: #{tpu_custom_call.1}
  #allocation0 [shape = 'u32[]', space=smem, size = 0x4, offset = 0x4, fixed_abs, tag = 'smem constant byte address 0x4 - core index']
  #allocation1 [shape = 'u32[144,128]{1,0:T(1,128)}', space=vmem, size = 0x12000, scoped, tag = 'internal scratch']
  %s0 = inlined_call_operand.hbm [shape: f32[16,32], index: 0, kind: input, shape index: {}]
  %s1 = inlined_call_operand.vmem [shape: f32[1,32], index: 1, kind: input, shape index: {}]
  %s2 = inlined_call_operand.hbm [shape: f32[16,32], index: 2, kind: output, shape index: {}]
  %s3 = sld [smem:[#allocation0]]
  $region45: #{tpu_custom_call.1} parent=0
    _
  %s5 = ssub.s32 1, %s3
  %s6 = scalar_select 0, %s5, %s3
  $region1: #{tpu_custom_call.1} parent=0
    #allocation2 [shape = 'u8[8192]{0}', space=vmem, size = 0x2000, scoped, tag = 'input window, operand 0']
    #allocation3 [shape = 's32[2]{0}', space=sflag, size = 0x8, scoped, tag = 'scoped memory for tpu_custom_call.1']
    #allocation4 [shape = 's32[2]{0}', space=sflag, size = 0x8, scoped, tag = 'scoped memory for tpu_custom_call.1']
    #allocation5 [shape = 'u8[8192]{0}', space=vmem, size = 0x2000, scoped, tag = 'output window, operand 0']
    %7 = vsyncpa [#allocation3], 0
    %s8 = scalar_lea.sflag [#allocation3], 1
    %9 = vsyncpa %s8, 0
    %10 = vsyncpa [#allocation4], 0
    %s11 = scalar_lea.sflag [#allocation4], 1
    %12 = vsyncpa %s11, 0
    loop: start=0, step=1, limit=4
    $region2: #{tpu_custom_call.1} parent=1 // loop_pre_header
      _
    $region3: #{tpu_custom_call.1} parent=1 // loop_header
      %s14 = sphi 0, %s18
      %p15 = scmp.ge.s32.totalorder %s14, 4
      %s24 = sphi 0, %s26
      %s27 = sphi 0, %s24
      %s28 = sphi 0, %s27
      %s44 = sphi 0, %s28
      %s48 = sphi 0, %s48
      %s50 = sphi 0, %s48
      %s51 = sphi 0, %s50
      %s65 = sphi 0, %s51
      %s71 = sphi 0, %s73
      %s74 = sphi 0, %s71
      %s75 = sphi 0, %s74
      %s91 = sphi 0, %s75
    $region4: #{tpu_custom_call.1} parent=1 // loop_header_branch
      %17 = sbr.rel (%p15) target = $region8
    $region5: #{tpu_custom_call.1} parent=1 // loop_body
      %s19 = ssub.s32 %s14, 1
      %s20 = ssub.s32 %s14, 2
      %s21 = sadd.s32 %s14, 1
      %s22 = ssub.s32 %s14, %s21
      %p23 = scmp.eq.s32.totalorder %s22, 0
      %s25 = sadd.s32 %s24, 1
      %s26 = scalar_select %p23, %s24, %s25
      %p29 = pneg %p23
      %p30 = scmp.eq.s32.totalorder %s14, 1
      %p31 = por %p29, %p30
      %p32 = scmp.ne.s32.totalorder %s24, %s27
      %p33 = scmp.eq.s32.totalorder %s14, 0
      %p34 = por %p32, %p33
      %p35 = scmp.ne.s32.totalorder %s24, %s27
      %p36 = scmp.eq.s32.totalorder %s19, 1
      %p37 = por %p35, %p36
      %p38 = scmp.ne.s32.totalorder %s27, %s28
      %p39 = scmp.eq.s32.totalorder %s19, 0
      %p40 = por %p38, %p39
      %p41 = scmp.ne.s32.totalorder %s27, %s28
      %p42 = scmp.eq.s32.totalorder %s20, 1
      %p43 = por %p41, %p42
      %p45 = scmp.ne.s32.totalorder %s28, %s44
      %p46 = scmp.eq.s32.totalorder %s20, 0
      %p47 = por %p45, %p46
      %s49 = sadd.s32 %s48, 1
      %p52 = scmp.eq.s32.totalorder %s14, 1
      %p53 = scmp.ne.s32.totalorder %s48, %s50
      %p54 = scmp.eq.s32.totalorder %s14, 0
      %p55 = por %p53, %p54
      %p56 = scmp.ne.s32.totalorder %s48, %s50
      %p57 = scmp.eq.s32.totalorder %s19, 1
      %p58 = por %p56, %p57
      %p59 = scmp.ne.s32.totalorder %s50, %s51
      %p60 = scmp.eq.s32.totalorder %s19, 0
      %p61 = por %p59, %p60
      %p62 = scmp.ne.s32.totalorder %s50, %s51
      %p63 = scmp.eq.s32.totalorder %s20, 1
      %p64 = por %p62, %p63
      %p66 = scmp.ne.s32.totalorder %s51, %s65
      %p67 = scmp.eq.s32.totalorder %s20, 0
      %p68 = por %p66, %p67
      %s69 = ssub.s32 %s14, %s21
      %p70 = scmp.eq.s32.totalorder %s69, 0
      %s72 = sadd.s32 %s71, 1
      %s73 = scalar_select %p70, %s71, %s72
      %p76 = pneg %p70
      %p77 = scmp.eq.s32.totalorder %s14, 1
      %p78 = por %p76, %p77
      %p79 = scmp.ne.s32.totalorder %s71, %s74
      %p80 = scmp.eq.s32.totalorder %s14, 0
      %p81 = por %p79, %p80
      %p82 = scmp.ne.s32.totalorder %s71, %s74
      %p83 = scmp.eq.s32.totalorder %s19, 1
      %p84 = por %p82, %p83
      %p85 = scmp.ne.s32.totalorder %s74, %s75
      %p86 = scmp.eq.s32.totalorder %s19, 0
      %p87 = por %p85, %p86
      %p88 = scmp.ne.s32.totalorder %s74, %s75
      %p89 = scmp.eq.s32.totalorder %s20, 1
      %p90 = por %p88, %p89
      %p92 = scmp.ne.s32.totalorder %s75, %s91
      %p93 = scmp.eq.s32.totalorder %s20, 0
      %p94 = por %p92, %p93
      %p95 = scmp.le.s32.totalorder 1, %s14
      %p96 = scmp.lt.s32.totalorder %s14, 3
      %p97 = pnand %p95, %p96
      %p98 = pneg %p97
      // Predicated region
      $region9: #{tpu_custom_call.1} parent=5 // pred_check
        _
      $region10: #{tpu_custom_call.1} parent=5 // pred_check_branch
        %100 = sbr.rel (%p97) target = $region12
      $region11: #{tpu_custom_call.1} parent=5 // pred_region
        %s101 = ssub.s32 %s14, 1
        // Predicated region
        $region13: #{tpu_custom_call.1} parent=11 // pred_check
          %p102 = pneg %p61
        $region14: #{tpu_custom_call.1} parent=11 // pred_check_branch
          %104 = sbr.rel (%p102) target = $region16
        $region15: #{tpu_custom_call.1} parent=11 // pred_region
          _
        $region16: #{tpu_custom_call.1} parent=11 // pred_fallthru
          _
      $region12: #{tpu_custom_call.1} parent=5 // pred_fallthru
        _
      %p105 = scmp.lt.s32.totalorder %s14, 2
      // Predicated region
      $region17: #{tpu_custom_call.1} parent=5 // pred_check
        %p106 = pneg %p105
      $region18: #{tpu_custom_call.1} parent=5 // pred_check_branch
        %108 = sbr.rel (%p106) target = $region20
      $region19: #{tpu_custom_call.1} parent=5 // pred_region
        // Predicated region
        $region21: #{tpu_custom_call.1} parent=19 // pred_check
          %p109 = pneg %p34
        $region22: #{tpu_custom_call.1} parent=19 // pred_check_branch
          %111 = sbr.rel (%p109) target = $region24
        $region23: #{tpu_custom_call.1} parent=19 // pred_region
          %s112 = sand.u32 %s24, 1
          %s113 = scalar_lea.sflag [#allocation3], %s112
          %s114 = sand.u32 %s24, 1
          %s115 = smul.addr %s114, 8
          %s116 = scalar_lea.vmem [#allocation2], %s115
          %s118 = ssub.s32 128, 128
          %119 = vsyncadd %s113, %s118
          %s120 = smul.addr %s14, 128
          %s121 = scalar_lea.hbm %s0, %s120
          %s123 = sshll.u32 %s116, 4
          %s124 = int_to_ptr.vmem [resolvable:$true] %s123
          %126 = dma.hbm_to_vmem [thread:$0]  %s121, 128, %s124, %s113
        $region24: #{tpu_custom_call.1} parent=19 // pred_fallthru
          _
      $region20: #{tpu_custom_call.1} parent=5 // pred_fallthru
        _
      %p127 = scmp.le.s32.totalorder 1, %s14
      %p128 = scmp.lt.s32.totalorder %s14, 3
      %p129 = pnand %p127, %p128
      %p130 = pneg %p129
      // Predicated region
      $region25: #{tpu_custom_call.1} parent=5 // pred_check
        _
      $region26: #{tpu_custom_call.1} parent=5 // pred_check_branch
        %132 = sbr.rel (%p129) target = $region28
      $region27: #{tpu_custom_call.1} parent=5 // pred_region
        %s133 = ssub.s32 %s14, 1
        %s134 = sand.u32 %s27, 1
        %s135 = scalar_lea.sflag [#allocation3], %s134
        %s136 = sand.u32 %s27, 1
        %s137 = smul.addr %s136, 8
        %s138 = scalar_lea.vmem [#allocation2], %s137
        // Predicated region
        $region29: #{tpu_custom_call.1} parent=27 // pred_check
          %p139 = pneg %p40
        $region30: #{tpu_custom_call.1} parent=27 // pred_check_branch
          %141 = sbr.rel (%p139) target = $region32
        $region31: #{tpu_custom_call.1} parent=27 // pred_region
          %142 = dma.done %s135, 128
        $region32: #{tpu_custom_call.1} parent=27 // pred_fallthru
          _
        %s143 = sand.u32 %s27, 1
        %s144 = scalar_lea.sflag [#allocation3], %s143
        %s145 = sand.u32 %s27, 1
        %s146 = smul.addr %s145, 8
        %s147 = scalar_lea.vmem [#allocation2], %s146
        %p148 = pneg %p40
        %p149 = pneg %p37
        %p150 = pneg %p61
        %p151 = pneg %p58
        %p152 = pneg %p87
        %p153 = pneg %p84
        %s154 = sand.u32 %s74, 1
        %s155 = scalar_lea.sflag [#allocation4], %s154
        %s156 = sand.u32 %s74, 1
        %s157 = smul.addr %s156, 8
        %s158 = scalar_lea.vmem [#allocation5], %s157
        %v159 = vld [vmem:[%s138] sm:$0xff]
        %v160 = vmul.f32 %v159, %v159
        %vm161 = vcmask 261120
        %v162 = vsel %vm161, %v160, 0.0
        %163 = vadd.xlane.f32.xlu0 %v162
        %v164 = vpop.xlane.xlu0 %163
        %v165 = vmul.f32 %v164, 0.03125
        %v166 = vadd.f32 %v165, 1e-05
        %v167 = vrsqrt.pop %v166
        %v168 = vld [vmem:[%s1] sm:$0x1]
        %v169 = vmul.f32 %v159, %v167
        %v171 = vlaneseq
        %v172 = vshrl.u32 %v171, 7
        %v173 = vsub.s32 0, %v172
        %v174 = vrot.slane %v168, %v173
        %v176 = vmul.f32 %v169, %v174
        %177 = vst.msk [vmem:[%s158] sm:$0xff] %vm161, %v176
        %s178 = sand.u32 %s74, 1
        %s179 = scalar_lea.sflag [#allocation4], %s178
        %s180 = sand.u32 %s74, 1
        %s181 = smul.addr %s180, 8
        %s182 = scalar_lea.vmem [#allocation5], %s181
        // Predicated region
        $region33: #{tpu_custom_call.1} parent=27 // pred_check
          %p183 = pneg %p84
        $region34: #{tpu_custom_call.1} parent=27 // pred_check_branch
          %185 = sbr.rel (%p183) target = $region36
        $region35: #{tpu_custom_call.1} parent=27 // pred_region
          %s187 = ssub.s32 128, 128
          %188 = vsyncadd %s179, %s187
          %s189 = smul.addr %s19, 128
          %s190 = scalar_lea.hbm %s2, %s189
          %s192 = sshll.u32 %s182, 4
          %s193 = int_to_ptr.vmem [resolvable:$true] %s192
          %195 = dma.vmem_to_hbm [thread:$0]  %s193, 128, %s190, %s179
        $region36: #{tpu_custom_call.1} parent=27 // pred_fallthru
          _
      $region28: #{tpu_custom_call.1} parent=5 // pred_fallthru
        _
      %p196 = scmp.le.s32.totalorder 2, %s14
      // Predicated region
      $region37: #{tpu_custom_call.1} parent=5 // pred_check
        %p197 = pneg %p196
      $region38: #{tpu_custom_call.1} parent=5 // pred_check_branch
        %199 = sbr.rel (%p197) target = $region40
      $region39: #{tpu_custom_call.1} parent=5 // pred_region
        %s200 = ssub.s32 %s14, 2
        // Predicated region
        $region41: #{tpu_custom_call.1} parent=39 // pred_check
          %p201 = pneg %p90
        $region42: #{tpu_custom_call.1} parent=39 // pred_check_branch
          %203 = sbr.rel (%p201) target = $region44
        $region43: #{tpu_custom_call.1} parent=39 // pred_region
          %s204 = sand.u32 %s75, 1
          %s205 = scalar_lea.sflag [#allocation4], %s204
          %s206 = sand.u32 %s75, 1
          %s207 = smul.addr %s206, 8
          %s208 = scalar_lea.vmem [#allocation5], %s207
          %209 = dma.done %s205, 128
        $region44: #{tpu_custom_call.1} parent=39 // pred_fallthru
          _
      $region40: #{tpu_custom_call.1} parent=5 // pred_fallthru
        _
    $region6: #{tpu_custom_call.1} parent=1 // loop_footer
      %s18 = sadd.s32 1, %s14
    $region7: #{tpu_custom_call.1} parent=1 // loop_footer_branch
      %13 = sbr.rel target = $region3
    $region8: #{tpu_custom_call.1} parent=1 // loop_exit
      _
    %210 = vsyncpa [#allocation3], 1
    %s211 = scalar_lea.sflag [#allocation3], 1
    %212 = vsyncpa %s211, 1
    %213 = vsyncpa [#allocation4], 1
    %s214 = scalar_lea.sflag [#allocation4], 1
    %215 = vsyncpa %s214, 1

</llo_original>
